<compile_context>
chip_gen: v7x
topology: tpu7x:2x2x1
jax: 0.10.0
libtpu: 0.0.40
codegen_flags: <defaults>
</compile_context>

<pallas_src>
import jax
import jax.numpy as jnp
from jax.experimental import pallas as pl
from jax.experimental.pallas import tpu as pltpu


_MAX_LANES = 8192                   # upper bound on lane-dense cols (multiple of 128)
_SUBLANE_ALIGN = 32                 # covers f32 (8), bf16 (16), int8/fp8 (32) packing
_MAX_BLOCK_BYTES = 4 * 1024 * 1024  # ~4 MiB block -> in+out double-buffered ~16 MiB VMEM


def _identity_kernel(x_ref, o_ref):
    # Pure pass-through: copy the whole VMEM tile.
    o_ref[...] = x_ref[...]


def _round_up(a: int, b: int) -> int:
    return (a + b - 1) // b * b


def identity(x: jax.Array) -> jax.Array:
    """Identity forward pass: returns x unchanged (same shape & dtype).

    NOTE: semantically this could just `return x`; the Pallas kernel is kept so
    the op is exercised, with input/output aliasing so it costs no extra HBM
    allocation.
    """
    orig_shape = x.shape
    dtype = x.dtype
    n = x.size
    if n == 0:
        return x

    itemsize = jnp.dtype(dtype).itemsize

    # Lane-dense columns: largest power-of-two multiple of 128 (<= _MAX_LANES)
    # that still leaves at least one full 32-row tile worth of real data.
    cols = 128
    while cols * 2 <= _MAX_LANES and n >= cols * 2 * _SUBLANE_ALIGN:
        cols *= 2

    rows = pl.cdiv(n, cols)
    rows_aligned = _round_up(rows, _SUBLANE_ALIGN)

    # Block rows: as large as possible while keeping one block <= ~4 MiB, and a
    # multiple of 32 sublanes (dtype-agnostic alignment). Portable across
    # v5e/v6e (128 MiB VMEM) and v7x (64 MiB VMEM) once double-buffered.
    max_rows = max(
        _SUBLANE_ALIGN,
        (_MAX_BLOCK_BYTES // (cols * itemsize)) // _SUBLANE_ALIGN * _SUBLANE_ALIGN,
    )
    tile_rows = min(max_rows, rows_aligned)
    rows_padded = _round_up(rows_aligned, tile_rows)
    padded = rows_padded * cols

    flat = x.reshape(-1)
    if padded != n:
        flat = jnp.pad(flat, (0, padded - n))
    x2d = flat.reshape(rows_padded, cols)

    grid = (rows_padded // tile_rows,)
    block = (tile_rows, cols)

    out2d = pl.pallas_call(
        _identity_kernel,
        out_shape=jax.ShapeDtypeStruct((rows_padded, cols), dtype),
        grid_spec=pltpu.PrefetchScalarGridSpec(
            num_scalar_prefetch=0,
            grid=grid,
            in_specs=[pl.BlockSpec(block, lambda i: (i, 0))],
            out_specs=pl.BlockSpec(block, lambda i: (i, 0)),
        ),
        # Output reuses the input buffer -> no duplicate HBM allocation.
        input_output_aliases={0: 0},
        compiler_params=pltpu.CompilerParams(
            dimension_semantics=("parallel",),
        ),
        cost_estimate=pl.CostEstimate(
            flops=0, transcendentals=0, bytes_accessed=2 * n * itemsize
        ),
    )(x2d)

    out = out2d.reshape(-1)
    if padded != n:
        out = out[:n]
    return out.reshape(orig_shape)


if __name__ == "__main__":
    key = jax.random.PRNGKey(0)
    # Small NCHW input consistent with a typical conv-style module.
    x = jax.random.normal(key, (2, 4, 16, 16), dtype=jnp.float32)

    y = identity(x)
    jax.block_until_ready(y)

    assert y.shape == x.shape and y.dtype == x.dtype
    assert bool(jnp.all(y == x))
    print("KERNEL_OK")
</pallas_src>

<mosaic_0001>
module attributes {stable_mosaic.version = 11 : i64} {
  func.func @_identity_kernel(%arg0: i32, %arg1: memref<32x128xf32, #tpu.memory_space<vmem>>, %arg2: memref<32x128xf32, #tpu.memory_space<vmem>>) attributes {dimension_semantics = [#tpu.dimension_semantics<parallel>], iteration_bounds = array<i64: 1>, scalar_prefetch = 0 : i64, scratch_operands = 0 : i64, tpu.core_type = #tpu.core_type<tc>, window_params = [{transform_indices = @transform_0, window_bounds = array<i64: 32, 128>}, {transform_indices = @transform_1, window_bounds = array<i64: 32, 128>}]} {
    %c0 = arith.constant 0 : index
    %c0_0 = arith.constant 0 : index
    %0 = vector.load %arg1[%c0, %c0_0] : memref<32x128xf32, #tpu.memory_space<vmem>>, vector<32x128xf32>
    %c0_1 = arith.constant 0 : index
    %c0_2 = arith.constant 0 : index
    %1 = vector.load %arg2[%c0_1, %c0_2] : memref<32x128xf32, #tpu.memory_space<vmem>>, vector<32x128xf32>
    tpu.vector_store %arg2[%c0_1, %c0_2], %0 {strides = array<i32>} : memref<32x128xf32, #tpu.memory_space<vmem>>, vector<32x128xf32>,
    return
  }
  func.func @transform_0(%arg0: i32) -> (i32, i32) {
    %c0_i32 = arith.constant 0 : i32
    %c0_i32_0 = arith.constant 0 : i32
    return %arg0, %c0_i32 : i32, i32
  }
  func.func @transform_1(%arg0: i32) -> (i32, i32) {
    %c0_i32 = arith.constant 0 : i32
    %c0_i32_0 = arith.constant 0 : i32
    return %arg0, %c0_i32 : i32, i32
  }
}

</mosaic_0001>

<llo_original>
// kernel: tpu_custom_call.1
$region0: #{tpu_custom_call.1}
  #allocation0 [shape = 'u32[]', space=smem, size = 0x4, offset = 0x4, fixed_abs, tag = 'smem constant byte address 0x4 - core index']
  #allocation1 [shape = 'u32[144,128]{1,0:T(1,128)}', space=vmem, size = 0x12000, scoped, tag = 'internal scratch']
  %s0 = inlined_call_operand.hbm [shape: f32[32,128], index: 0, kind: input, shape index: {}, may-alias: {0,1}]
  %s1 = inlined_call_operand.hbm [shape: f32[32,128], index: 1, kind: output, shape index: {}, may-alias: {0,1}]
  %s2 = sld [smem:[#allocation0]]
  $region18: #{tpu_custom_call.1} parent=0
    _
  %s4 = ssub.s32 1, %s2
  %s5 = scalar_select 0, %s4, %s2
  $region1: #{tpu_custom_call.1} parent=0
    #allocation2 [shape = 'u8[16384]{0}', space=vmem, size = 0x4000, scoped, tag = 'input window, operand 0, single buffered']
    #allocation3 [shape = 's32[1]{0}', space=sflag, size = 0x4, scoped, tag = 'scoped memory for tpu_custom_call.1']
    #allocation4 [shape = 's32[1]{0}', space=sflag, size = 0x4, scoped, tag = 'scoped memory for tpu_custom_call.1']
    #allocation5 [shape = 'u8[16384]{0}', space=vmem, size = 0x4000, scoped, tag = 'output window, operand 0, single buffered']
    %6 = vsyncpa [#allocation3], 0
    %7 = vsyncpa [#allocation4], 0
    // Predicated region
    $region2: #{tpu_custom_call.1} parent=1 // pred_check
      _
    $region3: #{tpu_custom_call.1} parent=1 // pred_check_branch
      %9 = sbr.rel (0) target = $region5
    $region4: #{tpu_custom_call.1} parent=1 // pred_region
      %s11 = ssub.s32 512, 512
      %12 = vsyncadd [#allocation3], %s11
      %s13 = sshll.u32 [#allocation2], 4
      %s14 = int_to_ptr.vmem [resolvable:$true] %s13
      %19 = dma.hbm_to_vmem [thread:$0]  %s0, 512, %s14, [#allocation3], 128, 128, 8
    $region5: #{tpu_custom_call.1} parent=1 // pred_fallthru
      _
    // Predicated region
    $region6: #{tpu_custom_call.1} parent=1 // pred_check
      _
    $region7: #{tpu_custom_call.1} parent=1 // pred_check_branch
      %21 = sbr.rel (0) target = $region9
    $region8: #{tpu_custom_call.1} parent=1 // pred_region
      %22 = dma.done [#allocation3], 512
    $region9: #{tpu_custom_call.1} parent=1 // pred_fallthru
      _
    %v23 = vld [vmem:[#allocation2] sm:$0xff]
    %v24 = vld [vmem:[#allocation2 + $0x8] sm:$0xff]
    %v25 = vld [vmem:[#allocation2 + $0x10] sm:$0xff]
    %v26 = vld [vmem:[#allocation2 + $0x18] sm:$0xff]
    %27 = vst [vmem:[#allocation5] sm:$0xff] %v23
    %28 = vst [vmem:[#allocation5 + $0x8] sm:$0xff] %v24
    %29 = vst [vmem:[#allocation5 + $0x10] sm:$0xff] %v25
    %30 = vst [vmem:[#allocation5 + $0x18] sm:$0xff] %v26
    // Predicated region
    $region10: #{tpu_custom_call.1} parent=1 // pred_check
      _
    $region11: #{tpu_custom_call.1} parent=1 // pred_check_branch
      %32 = sbr.rel (0) target = $region13
    $region12: #{tpu_custom_call.1} parent=1 // pred_region
      %s34 = ssub.s32 512, 512
      %35 = vsyncadd [#allocation4], %s34
      %s36 = sshll.u32 [#allocation5], 4
      %s37 = int_to_ptr.vmem [resolvable:$true] %s36
      %42 = dma.vmem_to_hbm [thread:$0]  %s37, 512, %s1, [#allocation4], 128, 128, 8
    $region13: #{tpu_custom_call.1} parent=1 // pred_fallthru
      _
    // Predicated region
    $region14: #{tpu_custom_call.1} parent=1 // pred_check
      _
    $region15: #{tpu_custom_call.1} parent=1 // pred_check_branch
      %44 = sbr.rel (0) target = $region17
    $region16: #{tpu_custom_call.1} parent=1 // pred_region
      %45 = dma.done [#allocation4], 512
    $region17: #{tpu_custom_call.1} parent=1 // pred_fallthru
      _
    %46 = vsyncpa [#allocation3], 1
    %47 = vsyncpa [#allocation4], 1

</llo_original>
